<compile_context>
chip_gen: v7x
topology: tpu7x:2x2x1
jax: 0.10.0
libtpu: 0.0.40
codegen_flags: <defaults>
</compile_context>

<pallas_src>
import functools

import jax
import jax.numpy as jnp
from jax.experimental import pallas as pl
from jax.experimental.pallas import tpu as pltpu

_LANE = 128


def _round_down(x: int, m: int) -> int:
    return (x // m) * m


def _sublane_multiple(dtype) -> int:
    """Row-tile granularity: sub-32-bit dtypes pack rows along sublanes."""
    itemsize = jnp.dtype(dtype).itemsize
    if itemsize >= 4:
        return 8
    if itemsize == 2:
        return 16
    return 32


@functools.lru_cache(maxsize=None)
def _vmem_budget():
    """(live-VMEM target, scoped-VMEM limit) in bytes, chip-aware."""
    target, limit = 16 << 20, 40 << 20          # safe default (v7x: 64 MiB physical)
    try:
        cap = getattr(pltpu.get_tpu_info(), "vmem_capacity_bytes", 0) or 0
        if cap >= (100 << 20):                   # v5e / v6e: 128 MiB physical VMEM
            target, limit = 32 << 20, 64 << 20
    except Exception:
        pass
    return target, limit


def _softmax_kernel(x_ref, o_ref, *, axis):
    """Numerically stable softmax along `axis` of the VMEM tile."""
    x = x_ref[...]
    m = jnp.max(x, axis=axis, keepdims=True)
    # Only exp's operand/result becomes a full f32 temporary; max/sub stay in
    # the I/O dtype (exact for f32 inputs; native bf16 VPU on v6e/v7x).
    e = jnp.exp((x - m).astype(jnp.float32))
    s = jnp.sum(e, axis=axis, keepdims=True)
    # EUP approximate reciprocal + one Newton step (~1 ulp of a true divide),
    # keeps the heavy lift off the VALU.
    r = pl.reciprocal(s, approx=True)
    r = r * (2.0 - s * r)
    o_ref[...] = (e * r).astype(o_ref.dtype)


def _softmax_2d(x2: jax.Array) -> jax.Array:
    """Softmax over the last axis of a (rows, C) slab (lane-axis reduction)."""
    rows, C = x2.shape
    dtype = x2.dtype
    itemsize = jnp.dtype(dtype).itemsize
    g = _sublane_multiple(dtype)
    target, limit = _vmem_budget()

    # Per-row live bytes: double-buffered in + out blocks (I/O dtype) plus ~2
    # block-sized f32 temporaries (exp result, scaled output) inside the kernel.
    per_row = C * (4 * itemsize + 2 * 4) + 64
    block_rows = max(g, _round_down(target // per_row, g))
    if block_rows >= rows:
        block_rows = rows                        # full dim is always a legal block
    # Keep >=4 grid steps when possible: feeds both v7x TensorCores and keeps
    # the DMA pipeline overlapped (per-step overhead is negligible here).
    while block_rows > g and pl.cdiv(rows, block_rows) < 4:
        block_rows = max(g, _round_down(block_rows // 2, g))
    # TODO(synk): for tiny C (<128) fold k=128//C rows into the lane axis for
    # lane-dense DMA; skipped to avoid in-kernel lane-splitting relayouts.
    # TODO(synk): for C so large that one g-row block exceeds VMEM, switch to a
    # two-pass / online softmax over C tiles.

    grid = (pl.cdiv(rows, block_rows),)
    return pl.pallas_call(
        functools.partial(_softmax_kernel, axis=-1),
        out_shape=jax.ShapeDtypeStruct((rows, C), dtype),
        grid_spec=pltpu.PrefetchScalarGridSpec(
            num_scalar_prefetch=0,
            grid=grid,
            in_specs=[pl.BlockSpec((block_rows, C), lambda i: (i, 0))],
            out_specs=pl.BlockSpec((block_rows, C), lambda i: (i, 0)),
        ),
        compiler_params=pltpu.CompilerParams(
            dimension_semantics=("parallel",),
            vmem_limit_bytes=limit,
        ),
        cost_estimate=pl.CostEstimate(
            flops=5 * rows * C,
            transcendentals=rows * C,
            bytes_accessed=2 * rows * C * itemsize,
        ),
    )(x2)


def _softmax_3d(x3: jax.Array):
    """Softmax over axis=1 of a (pre, C, post) slab (sublane-axis reduction).

    Returns None if a full-C block does not fit the VMEM budget (caller falls
    back to the transpose path)."""
    pre, C, post = x3.shape
    dtype = x3.dtype
    itemsize = jnp.dtype(dtype).itemsize
    target, limit = _vmem_budget()

    per_elem = 4 * itemsize + 2 * 4 + 4
    budget_elems = max(1, target // per_elem)

    if post <= _LANE or C * post <= budget_elems:
        tile_post = post
    else:
        tile_post = max(_LANE, min(_round_down(post, _LANE),
                                   _round_down(budget_elems // C, _LANE)))
    if C * tile_post > budget_elems:
        return None
    tile_pre = max(1, min(pre, budget_elems // (C * tile_post)))

    def _steps():
        return pl.cdiv(pre, tile_pre) * pl.cdiv(post, tile_post)

    while tile_pre > 1 and _steps() < 4:
        tile_pre = max(1, tile_pre // 2)
    while tile_post >= 2 * _LANE and _steps() < 4:
        tile_post = max(_LANE, _round_down(tile_post // 2, _LANE))

    grid = (pl.cdiv(pre, tile_pre), pl.cdiv(post, tile_post))
    return pl.pallas_call(
        functools.partial(_softmax_kernel, axis=1),
        out_shape=jax.ShapeDtypeStruct((pre, C, post), dtype),
        grid_spec=pltpu.PrefetchScalarGridSpec(
            num_scalar_prefetch=0,
            grid=grid,
            in_specs=[pl.BlockSpec((tile_pre, C, tile_post),
                                   lambda i, j: (i, 0, j))],
            out_specs=pl.BlockSpec((tile_pre, C, tile_post),
                                   lambda i, j: (i, 0, j)),
        ),
        compiler_params=pltpu.CompilerParams(
            dimension_semantics=("parallel", "parallel"),
            vmem_limit_bytes=limit,
        ),
        cost_estimate=pl.CostEstimate(
            flops=5 * pre * C * post,
            transcendentals=pre * C * post,
            bytes_accessed=2 * pre * C * post * itemsize,
        ),
    )(x3)


def pallas_softmax(x: jax.Array, dim: int = -1) -> jax.Array:
    """Softmax along `dim`, matching torch.softmax semantics."""
    ndim = x.ndim
    if ndim == 0:
        return jnp.ones_like(x)
    if x.size == 0:
        return x
    dim = dim % ndim
    shape = x.shape
    C = shape[dim]
    pre = 1
    for d in shape[:dim]:
        pre *= d
    post = 1
    for d in shape[dim + 1:]:
        post *= d

    if post == 1:
        # dim is (effectively) the last axis: flatten to (rows, C), reduce lanes.
        return _softmax_2d(x.reshape(pre, C)).reshape(shape)

    # dim is a middle axis: reduce along sublanes, no moveaxis HBM transposes.
    out = _softmax_3d(x.reshape(pre, C, post))
    if out is not None:
        return out.reshape(shape)

    # Fallback for huge C on a middle axis: transpose round-trip + 2D path.
    xt = jnp.moveaxis(x, dim, -1)
    out = _softmax_2d(xt.reshape(-1, C)).reshape(xt.shape)
    return jnp.moveaxis(out, -1, dim)


if __name__ == "__main__":
    key = jax.random.PRNGKey(0)
    k1, k2 = jax.random.split(key)

    # Module default: Softmax(dim=-1) on a small NCHW-like tensor.
    x = jax.random.normal(k1, (2, 4, 16, 16), dtype=jnp.float32)
    y = jax.block_until_ready(pallas_softmax(x, dim=-1))
    assert jnp.allclose(y, jax.nn.softmax(x, axis=-1), atol=1e-5, rtol=1e-5), \
        "mismatch vs reference (dim=-1)"
    assert jnp.allclose(jnp.sum(y, axis=-1), 1.0, atol=1e-5), "rows do not sum to 1"

    # Channel softmax (dim=1): exercises the transpose-free (pre, C, post) path.
    y1 = jax.block_until_ready(pallas_softmax(x, dim=1))
    assert jnp.allclose(y1, jax.nn.softmax(x, axis=1), atol=1e-5, rtol=1e-5), \
        "mismatch vs reference (dim=1)"

    # Ragged last dim + row count not a multiple of the block: exercises
    # full-dim lane blocks and partial (masked) final row blocks.
    x3 = jax.random.normal(k2, (3, 37, 1000), dtype=jnp.float32)
    y3 = jax.block_until_ready(pallas_softmax(x3, dim=-1))
    assert jnp.allclose(y3, jax.nn.softmax(x3, axis=-1), atol=1e-5, rtol=1e-5), \
        "mismatch vs reference (ragged)"

    print("KERNEL_OK")
</pallas_src>

<mosaic_0001>
module attributes {stable_mosaic.version = 11 : i64} {
  func.func @_softmax_kernel(%arg0: i32, %arg1: memref<32x16xf32, #tpu.memory_space<vmem>>, %arg2: memref<32x16xf32, #tpu.memory_space<vmem>>) attributes {dimension_semantics = [#tpu.dimension_semantics<parallel>], iteration_bounds = array<i64: 4>, scalar_prefetch = 0 : i64, scratch_operands = 0 : i64, tpu.core_type = #tpu.core_type<tc>, window_params = [{transform_indices = @transform_0, window_bounds = array<i64: 32, 16>}, {transform_indices = @transform_1, window_bounds = array<i64: 32, 16>}]} {
    %c0 = arith.constant 0 : index
    %c0_0 = arith.constant 0 : index
    %0 = vector.load %arg1[%c0, %c0_0] : memref<32x16xf32, #tpu.memory_space<vmem>>, vector<32x16xf32>
    %cst = arith.constant dense<0xFF800000> : vector<32xf32>
    %1 = vector.multi_reduction <maximumf>, %0, %cst [1] : vector<32x16xf32> to vector<32xf32>
    %2 = vector.shape_cast %1 : vector<32xf32> to vector<32x1xf32>
    %3 = vector.broadcast %2 : vector<32x1xf32> to vector<32x16xf32>
    %4 = arith.subf %0, %3 : vector<32x16xf32>
    %5 = math.exp %4 : vector<32x16xf32>
    %cst_1 = arith.constant dense<0.000000e+00> : vector<32xf32>
    %6 = vector.multi_reduction <add>, %5, %cst_1 [1] : vector<32x16xf32> to vector<32xf32>
    %7 = vector.shape_cast %6 : vector<32xf32> to vector<32x1xf32>
    %8 = tpu.reciprocal %7 {approx = true} : vector<32x1xf32> -> vector<32x1xf32>
    %9 = arith.mulf %7, %8 : vector<32x1xf32>
    %cst_2 = arith.constant 2.000000e+00 : f32
    %10 = vector.broadcast %cst_2 : f32 to vector<32x1xf32>
    %11 = arith.subf %10, %9 : vector<32x1xf32>
    %12 = arith.mulf %8, %11 : vector<32x1xf32>
    %13 = vector.broadcast %12 : vector<32x1xf32> to vector<32x16xf32>
    %14 = arith.mulf %5, %13 : vector<32x16xf32>
    %c0_3 = arith.constant 0 : index
    %c0_4 = arith.constant 0 : index
    %15 = vector.load %arg2[%c0_3, %c0_4] : memref<32x16xf32, #tpu.memory_space<vmem>>, vector<32x16xf32>
    tpu.vector_store %arg2[%c0_3, %c0_4], %14 {strides = array<i32>} : memref<32x16xf32, #tpu.memory_space<vmem>>, vector<32x16xf32>,
    return
  }
  func.func @transform_0(%arg0: i32) -> (i32, i32) {
    %c0_i32 = arith.constant 0 : i32
    %c0_i32_0 = arith.constant 0 : i32
    return %arg0, %c0_i32 : i32, i32
  }
  func.func @transform_1(%arg0: i32) -> (i32, i32) {
    %c0_i32 = arith.constant 0 : i32
    %c0_i32_0 = arith.constant 0 : i32
    return %arg0, %c0_i32 : i32, i32
  }
}

</mosaic_0001>

<llo_original>
// kernel: tpu_custom_call.1
$region0: #{tpu_custom_call.1}
  #allocation0 [shape = 'u32[]', space=smem, size = 0x4, offset = 0x4, fixed_abs, tag = 'smem constant byte address 0x4 - core index']
  #allocation1 [shape = 'u32[144,128]{1,0:T(1,128)}', space=vmem, size = 0x12000, scoped, tag = 'internal scratch']
  %s0 = inlined_call_operand.vmem [shape: f32[128,16], index: 0, kind: input, shape index: {}]
  %s1 = inlined_call_operand.vmem [shape: f32[128,16], index: 1, kind: output, shape index: {}]
  %s2 = sld [smem:[#allocation0]]
  $region37: #{tpu_custom_call.1} parent=0
    _
  %s4 = ssub.s32 1, %s2
  %s5 = scalar_select 0, %s4, %s2
  loop: start=0, step=1, limit=6
  $region2: #{tpu_custom_call.1} parent=0 // loop_pre_header
    _
  $region3: #{tpu_custom_call.1} parent=0 // loop_header
    %s7 = sphi 0, %s11
    %p8 = scmp.ge.s32.totalorder %s7, 6
    %s17 = sphi 0, %s19
    %s20 = sphi 0, %s17
    %s21 = sphi 0, %s20
    %s37 = sphi 0, %s21
    %s43 = sphi 0, %s45
    %s46 = sphi 0, %s43
    %s47 = sphi 0, %s46
    %s63 = sphi 0, %s47
  $region4: #{tpu_custom_call.1} parent=0 // loop_header_branch
    %10 = sbr.rel (%p8) target = $region8
  $region5: #{tpu_custom_call.1} parent=0 // loop_body
    %s12 = ssub.s32 %s7, 1
    %s13 = ssub.s32 %s7, 2
    %s14 = sadd.s32 %s7, 1
    %s15 = ssub.s32 %s7, %s14
    %p16 = scmp.eq.s32.totalorder %s15, 0
    %s18 = sadd.s32 %s17, 1
    %s19 = scalar_select %p16, %s17, %s18
    %p22 = pneg %p16
    %p23 = scmp.eq.s32.totalorder %s7, 3
    %p24 = por %p22, %p23
    %p25 = scmp.ne.s32.totalorder %s17, %s20
    %p26 = scmp.eq.s32.totalorder %s7, 0
    %p27 = por %p25, %p26
    %p28 = scmp.ne.s32.totalorder %s17, %s20
    %p29 = scmp.eq.s32.totalorder %s12, 3
    %p30 = por %p28, %p29
    %p31 = scmp.ne.s32.totalorder %s20, %s21
    %p32 = scmp.eq.s32.totalorder %s12, 0
    %p33 = por %p31, %p32
    %p34 = scmp.ne.s32.totalorder %s20, %s21
    %p35 = scmp.eq.s32.totalorder %s13, 3
    %p36 = por %p34, %p35
    %p38 = scmp.ne.s32.totalorder %s21, %s37
    %p39 = scmp.eq.s32.totalorder %s13, 0
    %p40 = por %p38, %p39
    %s41 = ssub.s32 %s7, %s14
    %p42 = scmp.eq.s32.totalorder %s41, 0
    %s44 = sadd.s32 %s43, 1
    %s45 = scalar_select %p42, %s43, %s44
    %p48 = pneg %p42
    %p49 = scmp.eq.s32.totalorder %s7, 3
    %p50 = por %p48, %p49
    %p51 = scmp.ne.s32.totalorder %s43, %s46
    %p52 = scmp.eq.s32.totalorder %s7, 0
    %p53 = por %p51, %p52
    %p54 = scmp.ne.s32.totalorder %s43, %s46
    %p55 = scmp.eq.s32.totalorder %s12, 3
    %p56 = por %p54, %p55
    %p57 = scmp.ne.s32.totalorder %s46, %s47
    %p58 = scmp.eq.s32.totalorder %s12, 0
    %p59 = por %p57, %p58
    %p60 = scmp.ne.s32.totalorder %s46, %s47
    %p61 = scmp.eq.s32.totalorder %s13, 3
    %p62 = por %p60, %p61
    %p64 = scmp.ne.s32.totalorder %s47, %s63
    %p65 = scmp.eq.s32.totalorder %s13, 0
    %p66 = por %p64, %p65
    %p67 = scmp.le.s32.totalorder 1, %s7
    %p68 = scmp.lt.s32.totalorder %s7, 5
    %p69 = pnand %p67, %p68
    %p70 = pneg %p69
    // Predicated region
    $region9: #{tpu_custom_call.1} parent=5 // pred_check
      _
    $region10: #{tpu_custom_call.1} parent=5 // pred_check_branch
      %72 = sbr.rel (%p69) target = $region12
    $region11: #{tpu_custom_call.1} parent=5 // pred_region
      %s73 = ssub.s32 %s7, 1
    $region12: #{tpu_custom_call.1} parent=5 // pred_fallthru
      _
    %p74 = scmp.lt.s32.totalorder %s7, 4
    // Predicated region
    $region13: #{tpu_custom_call.1} parent=5 // pred_check
      %p75 = pneg %p74
    $region14: #{tpu_custom_call.1} parent=5 // pred_check_branch
      %77 = sbr.rel (%p75) target = $region16
    $region15: #{tpu_custom_call.1} parent=5 // pred_region
      // Predicated region
      $region17: #{tpu_custom_call.1} parent=15 // pred_check
        %p78 = pneg %p27
      $region18: #{tpu_custom_call.1} parent=15 // pred_check_branch
        %80 = sbr.rel (%p78) target = $region20
      $region19: #{tpu_custom_call.1} parent=15 // pred_region
        %s81 = smul.u32 4, %s7
        %p82 = scmp.lt.s32.totalorder %s81, 15
        %s83 = scalar_select %p82, %s81, 15
        %s84 = smul.addr %s83, 8
        %s85 = scalar_lea.vmem %s0, %s84
        %s86 = smul.u32 4, %s7
      $region20: #{tpu_custom_call.1} parent=15 // pred_fallthru
        _
    $region16: #{tpu_custom_call.1} parent=5 // pred_fallthru
      _
    %p87 = scmp.le.s32.totalorder 1, %s7
    %p88 = scmp.lt.s32.totalorder %s7, 5
    %p89 = pnand %p87, %p88
    %p90 = pneg %p89
    // Predicated region
    $region21: #{tpu_custom_call.1} parent=5 // pred_check
      _
    $region22: #{tpu_custom_call.1} parent=5 // pred_check_branch
      %92 = sbr.rel (%p89) target = $region24
    $region23: #{tpu_custom_call.1} parent=5 // pred_region
      %s93 = ssub.s32 %s7, 1
      %s94 = smul.u32 4, %s12
      %p95 = scmp.lt.s32.totalorder %s94, 15
      %s96 = scalar_select %p95, %s94, 15
      %s97 = smul.addr %s96, 8
      %s98 = scalar_lea.vmem %s0, %s97
      %p99 = pneg %p33
      %p100 = pneg %p30
      %p101 = pneg %p59
      %p102 = pneg %p56
      %s103 = smul.u32 4, %s12
      %p104 = scmp.lt.s32.totalorder %s103, 15
      %s105 = scalar_select %p104, %s103, 15
      %s106 = smul.addr %s105, 8
      %s107 = scalar_lea.vmem %s1, %s106
      %s108 = smul.u32 4, %s12
      %p109 = scmp.lt.s32.totalorder %s108, 15
      %s110 = scalar_select %p109, %s108, 15
      %s111 = smul.addr %s110, 8
      %s112 = scalar_lea.vmem %s0, %s111
      %s113 = smul.u32 4, %s12
      %s114 = smul.u32 4, %s12
      %p115 = scmp.lt.s32.totalorder %s114, 15
      %s116 = scalar_select %p115, %s114, 15
      %s117 = smul.addr %s116, 8
      %s118 = scalar_lea.vmem %s1, %s117
      %s119 = smul.u32 4, %s12
      %v120 = vld [vmem:[%s112] sm:$0xff]
      %v121 = vld [vmem:[%s112 + $0x8] sm:$0xff]
      %v122 = vld [vmem:[%s112 + $0x10] sm:$0xff]
      %v123 = vld [vmem:[%s112 + $0x18] sm:$0xff]
      %vm124 = vcmask 130048
      %v125 = vsel %vm124, %v120, -inf
      %126 = vmax.xlane.f32.xlu0 %v125
      %v127 = vpop.xlane.xlu0 %126
      %v128 = vsel %vm124, %v121, -inf
      %129 = vmax.xlane.f32.xlu0 %v128
      %v130 = vpop.xlane.xlu0 %129
      %v131 = vsel %vm124, %v122, -inf
      %132 = vmax.xlane.f32.xlu0 %v131
      %v133 = vpop.xlane.xlu0 %132
      %v134 = vsel %vm124, %v123, -inf
      %135 = vmax.xlane.f32.xlu0 %v134
      %v136 = vpop.xlane.xlu0 %135
      %v137 = vsub.f32 %v120, %v127
      %v138 = vsub.f32 %v121, %v130
      %v139 = vsub.f32 %v122, %v133
      %v140 = vsub.f32 %v123, %v136
      %v141 = vmul.f32 %v137, 1.442695
      %v142 = vpow.pop %v141
      %v143 = vmul.f32 %v138, 1.442695
      %v144 = vpow.pop %v143
      %v145 = vmul.f32 %v139, 1.442695
      %v146 = vpow.pop %v145
      %v147 = vmul.f32 %v140, 1.442695
      %v148 = vpow.pop %v147
      %v149 = vsel %vm124, %v142, 0.0
      %150 = vadd.xlane.f32.xlu0 %v149
      %v151 = vpop.xlane.xlu0 %150
      %v152 = vsel %vm124, %v144, 0.0
      %153 = vadd.xlane.f32.xlu0 %v152
      %v154 = vpop.xlane.xlu0 %153
      %v155 = vsel %vm124, %v146, 0.0
      %156 = vadd.xlane.f32.xlu0 %v155
      %v157 = vpop.xlane.xlu0 %156
      %v158 = vsel %vm124, %v148, 0.0
      %159 = vadd.xlane.f32.xlu0 %v158
      %v160 = vpop.xlane.xlu0 %159
      %v161 = vrcp.pop %v151
      %v162 = vrcp.pop %v154
      %v163 = vrcp.pop %v157
      %v164 = vrcp.pop %v160
      %v165 = vmul.f32 %v151, %v161
      %v166 = vmul.f32 %v154, %v162
      %v167 = vmul.f32 %v157, %v163
      %v168 = vmul.f32 %v160, %v164
      %v169 = vsub.f32 2.0, %v165
      %v170 = vsub.f32 2.0, %v166
      %v171 = vsub.f32 2.0, %v167
      %v172 = vsub.f32 2.0, %v168
      %v173 = vmul.f32 %v161, %v169
      %v174 = vmul.f32 %v162, %v170
      %v175 = vmul.f32 %v163, %v171
      %v176 = vmul.f32 %v164, %v172
      %v177 = vmul.f32 %v142, %v173
      %v178 = vmul.f32 %v144, %v174
      %v179 = vmul.f32 %v146, %v175
      %v180 = vmul.f32 %v148, %v176
      %181 = vst.msk [vmem:[%s118] sm:$0xff] %vm124, %v177
      %182 = vst.msk [vmem:[%s118 + $0x8] sm:$0xff] %vm124, %v178
      %183 = vst.msk [vmem:[%s118 + $0x10] sm:$0xff] %vm124, %v179
      %184 = vst.msk [vmem:[%s118 + $0x18] sm:$0xff] %vm124, %v180
      %s185 = smul.u32 4, %s12
      %p186 = scmp.lt.s32.totalorder %s185, 15
      %s187 = scalar_select %p186, %s185, 15
      %s188 = smul.addr %s187, 8
      %s189 = scalar_lea.vmem %s1, %s188
      // Predicated region
      $region25: #{tpu_custom_call.1} parent=23 // pred_check
        %p190 = pneg %p56
      $region26: #{tpu_custom_call.1} parent=23 // pred_check_branch
        %192 = sbr.rel (%p190) target = $region28
      $region27: #{tpu_custom_call.1} parent=23 // pred_region
        %s193 = smul.u32 4, %s12
      $region28: #{tpu_custom_call.1} parent=23 // pred_fallthru
        _
    $region24: #{tpu_custom_call.1} parent=5 // pred_fallthru
      _
    %p194 = scmp.le.s32.totalorder 2, %s7
    // Predicated region
    $region29: #{tpu_custom_call.1} parent=5 // pred_check
      %p195 = pneg %p194
    $region30: #{tpu_custom_call.1} parent=5 // pred_check_branch
      %197 = sbr.rel (%p195) target = $region32
    $region31: #{tpu_custom_call.1} parent=5 // pred_region
      %s198 = ssub.s32 %s7, 2
      // Predicated region
      $region33: #{tpu_custom_call.1} parent=31 // pred_check
        %p199 = pneg %p62
      $region34: #{tpu_custom_call.1} parent=31 // pred_check_branch
        %201 = sbr.rel (%p199) target = $region36
      $region35: #{tpu_custom_call.1} parent=31 // pred_region
        %s202 = smul.u32 4, %s13
        %p203 = scmp.lt.s32.totalorder %s202, 15
        %s204 = scalar_select %p203, %s202, 15
        %s205 = smul.addr %s204, 8
        %s206 = scalar_lea.vmem %s1, %s205
      $region36: #{tpu_custom_call.1} parent=31 // pred_fallthru
        _
    $region32: #{tpu_custom_call.1} parent=5 // pred_fallthru
      _
  $region6: #{tpu_custom_call.1} parent=0 // loop_footer
    %s11 = sadd.s32 1, %s7
  $region7: #{tpu_custom_call.1} parent=0 // loop_footer_branch
    %6 = sbr.rel target = $region3
  $region8: #{tpu_custom_call.1} parent=0 // loop_exit
    _

</llo_original>
